<compile_context>
chip_gen: v7x
topology: tpu7x:2x2x1
jax: 0.10.0
libtpu: 0.0.40
codegen_flags: <defaults>
</compile_context>

<pallas_src>
import functools

import jax
import jax.numpy as jnp
from jax import lax
from jax.experimental import pallas as pl
from jax.experimental.pallas import tpu as pltpu


def _cast(t, dtype):
    return t if t.dtype == dtype else t.astype(dtype)


def hbmnet_kernel(x_ref,
                  w1_ref, b1_ref,
                  w2_ref, b2_ref,
                  w3_ref, b3_ref,
                  w4_ref, b4_ref,
                  o_ref,
                  *, matmul_dtype, ew_dtype):
    """Fused forward pass for one batch tile.

    x_ref: [tile_b, 5] row-major input block.
    All intermediates are feature-major [features, tile_b] (batch on lanes).
    """
    x = _cast(x_ref[...], matmul_dtype)                                     # [tb, 5]

    # Layer 1: contract on the feature axis of the row-major x tile
    # (w1 @ x^T); Mosaic handles the operand layout inside the MXU pass.
    h = lax.dot_general(w1_ref[...], x,
                        dimension_numbers=(((1,), (1,)), ((), ())),
                        preferred_element_type=jnp.float32)                 # [64, tb]
    h = jnp.maximum(_cast(h, ew_dtype) + b1_ref[...], 0)

    h = jnp.dot(w2_ref[...], _cast(h, matmul_dtype),
                preferred_element_type=jnp.float32)                         # [32, tb]
    h = jnp.maximum(_cast(h, ew_dtype) + b2_ref[...], 0)

    h = jnp.dot(w3_ref[...], _cast(h, matmul_dtype),
                preferred_element_type=jnp.float32)                         # [16, tb]
    h = jnp.maximum(_cast(h, ew_dtype) + b3_ref[...], 0)

    # Layer 4 (out_features == 1): broadcast-multiply + sublane reduction on
    # the VPU/XLU instead of an M=1 MXU pass.
    out = jnp.sum(w4_ref[...] * _cast(h, jnp.float32), axis=0, keepdims=True)
    o_ref[...] = (out + b4_ref[...]).astype(o_ref.dtype)                    # [1, tb]


def _device_kind():
    try:
        return jax.devices()[0].device_kind.lower()
    except Exception:
        return ""


def _device_tiling(kind):
    """(max_tile_b, tensorcores_per_chip) by TPU generation."""
    if "v7" in kind:
        return 1024, 2
    if "v5e" in kind or "v5 lite" in kind or "v5lite" in kind:
        # No bf16 VALU -> f32 intermediates; cap the tile to limit vreg spills.
        return 512, 1
    return 1024, 1


def _choose_tile_b(batch, *, max_tile, num_cores):
    if num_cores <= 1:
        # Single TensorCore: per-grid-step overhead (~0.35us) dominates the
        # tiny per-tile compute; take the largest tile (one step if possible).
        return batch if batch <= max_tile else max_tile
    # Two TensorCores (v7x): keep an even number of lane-aligned steps so both
    # cores get equal work under dimension_semantics=("parallel",).
    if batch <= 128:
        return batch            # too small to be worth splitting
    if batch <= 256:
        return 128              # two (possibly padded) tiles
    steps = 2 * pl.cdiv(batch, 2 * max_tile)
    tile = 128 * pl.cdiv(pl.cdiv(batch, steps), 128)
    return min(tile, max_tile)


def hbmnet_forward(x, params, *, tile_b=None, matmul_dtype=jnp.bfloat16,
                   ew_dtype=None):
    """x: [B, 5]. params: w1..w4 in PyTorch [out, in] orientation, b1..b4 columns."""
    B, F = x.shape
    assert F == 5

    kind = _device_kind()
    max_tile, num_cores = _device_tiling(kind)
    if ew_dtype is None:
        # Older generations (v2..v5) have no bf16 VALU -> keep elementwise f32.
        no_bf16_valu = any(g in kind for g in ("v2", "v3", "v4", "v5"))
        ew_dtype = (jnp.float32
                    if (matmul_dtype == jnp.float32 or no_bf16_valu)
                    else jnp.bfloat16)
    if tile_b is None:
        tile_b = _choose_tile_b(B, max_tile=max_tile, num_cores=num_cores)
    if tile_b != B:
        assert tile_b % 128 == 0, "multi-tile path needs lane-aligned tiles"

    Bp = tile_b * pl.cdiv(B, tile_b)
    x_in = x if Bp == B else jnp.pad(x, ((0, Bp - B), (0, 0)))

    # Pre-cast the (tiny) weights/biases once; layer 4 stays f32 (VPU path).
    w1 = _cast(params["w1"], matmul_dtype)
    w2 = _cast(params["w2"], matmul_dtype)
    w3 = _cast(params["w3"], matmul_dtype)
    b1 = _cast(params["b1"].reshape(-1, 1), ew_dtype)
    b2 = _cast(params["b2"].reshape(-1, 1), ew_dtype)
    b3 = _cast(params["b3"].reshape(-1, 1), ew_dtype)
    w4 = params["w4"].reshape(-1, 1).astype(jnp.float32)    # [16, 1]
    b4 = params["b4"].reshape(1, 1).astype(jnp.float32)     # [1, 1]

    grid = (Bp // tile_b,)

    def full_spec(arr):
        # Whole (tiny) array every step; constant block index -> no re-DMA.
        return pl.BlockSpec(arr.shape, lambda i: (0, 0))

    kernel = functools.partial(hbmnet_kernel,
                               matmul_dtype=matmul_dtype, ew_dtype=ew_dtype)

    out_fm = pl.pallas_call(
        kernel,
        out_shape=jax.ShapeDtypeStruct((1, Bp), jnp.float32),
        grid_spec=pltpu.PrefetchScalarGridSpec(
            num_scalar_prefetch=0,
            grid=grid,
            in_specs=[
                pl.BlockSpec((tile_b, 5), lambda i: (i, 0)),   # row-major x tile
                full_spec(w1), full_spec(b1),
                full_spec(w2), full_spec(b2),
                full_spec(w3), full_spec(b3),
                full_spec(w4), full_spec(b4),
            ],
            out_specs=pl.BlockSpec((1, tile_b), lambda i: (0, i)),  # lane-dense
        ),
        compiler_params=pltpu.CompilerParams(
            dimension_semantics=("parallel",)),
    )(x_in, w1, b1, w2, b2, w3, b3, w4, b4)

    # [1, Bp] -> [B, 1]: strip batch padding, back to PyTorch output shape.
    return out_fm[0, :B].reshape(B, 1)


def init_params(key):
    """Deterministic init mimicking nn.Linear default (uniform +/- 1/sqrt(fan_in)).

    Weights kept in PyTorch [out_features, in_features] orientation; biases [out, 1].
    """
    dims = [(5, 64), (64, 32), (32, 16), (16, 1)]
    params = {}
    keys = jax.random.split(key, 2 * len(dims))
    for idx, (fan_in, fan_out) in enumerate(dims):
        bound = 1.0 / jnp.sqrt(jnp.float32(fan_in))
        w = jax.random.uniform(keys[2 * idx], (fan_out, fan_in),
                               minval=-bound, maxval=bound, dtype=jnp.float32)
        b = jax.random.uniform(keys[2 * idx + 1], (fan_out, 1),
                               minval=-bound, maxval=bound, dtype=jnp.float32)
        params[f"w{idx + 1}"] = w
        params[f"b{idx + 1}"] = b
    return params


def reference_forward(x, params):
    """Pure-JAX reference matching nn.Linear semantics (y = x @ W.T + b)."""
    h = x
    for i in range(1, 5):
        w = params[f"w{i}"]
        b = params[f"b{i}"].reshape(1, -1)
        h = jnp.dot(h, w.T, precision=lax.Precision.HIGHEST) + b
        if i < 4:
            h = jnp.maximum(h, 0.0)
    return h


if __name__ == "__main__":
    key = jax.random.PRNGKey(0)
    pkey, k1, k2, k3 = jax.random.split(key, 4)

    params = init_params(pkey)

    # 1) small batch (features = 5), full-f32 path: tight tolerance.
    x = jax.random.normal(k1, (8, 5), dtype=jnp.float32)
    ref = reference_forward(x, params)
    out_f32 = jax.block_until_ready(
        hbmnet_forward(x, params, matmul_dtype=jnp.float32))
    assert out_f32.shape == (8, 1), out_f32.shape
    assert jnp.allclose(out_f32, ref, atol=1e-3, rtol=1e-3), (out_f32, ref)

    # 2) default bf16-operand path (f32 accumulation): looser tolerance.
    out_bf16 = jax.block_until_ready(hbmnet_forward(x, params))
    assert out_bf16.shape == (8, 1), out_bf16.shape
    assert jnp.allclose(out_bf16, ref, atol=5e-2, rtol=5e-2), (out_bf16, ref)

    # 3) forced multi-tile grid without padding (B = 3 * 128).
    x_big = jax.random.normal(k2, (384, 5), dtype=jnp.float32)
    ref_big = reference_forward(x_big, params)
    out_big = jax.block_until_ready(
        hbmnet_forward(x_big, params, tile_b=128, matmul_dtype=jnp.float32))
    assert out_big.shape == (384, 1), out_big.shape
    assert jnp.allclose(out_big, ref_big, atol=1e-3, rtol=1e-3)

    # 3b) chip-aware auto tiling on the same batch (exercises _choose_tile_b).
    out_auto = jax.block_until_ready(hbmnet_forward(x_big, params))
    assert out_auto.shape == (384, 1), out_auto.shape
    assert jnp.allclose(out_auto, ref_big, atol=5e-2, rtol=5e-2)

    # 4) batch that is not a tile multiple -> wrapper pads, result sliced back.
    x_odd = jax.random.normal(k3, (200, 5), dtype=jnp.float32)
    ref_odd = reference_forward(x_odd, params)
    out_odd = jax.block_until_ready(
        hbmnet_forward(x_odd, params, tile_b=128, matmul_dtype=jnp.float32))
    assert out_odd.shape == (200, 1), out_odd.shape
    assert jnp.allclose(out_odd, ref_odd, atol=1e-3, rtol=1e-3)

    print("KERNEL_OK")
</pallas_src>

<mosaic_0001>
module attributes {stable_mosaic.version = 11 : i64} {
  func.func @hbmnet_kernel(%arg0: i32, %arg1: memref<8x5xf32, #tpu.memory_space<vmem>>, %arg2: memref<64x5xf32, #tpu.memory_space<vmem>>, %arg3: memref<64x1xf32, #tpu.memory_space<vmem>>, %arg4: memref<32x64xf32, #tpu.memory_space<vmem>>, %arg5: memref<32x1xf32, #tpu.memory_space<vmem>>, %arg6: memref<16x32xf32, #tpu.memory_space<vmem>>, %arg7: memref<16x1xf32, #tpu.memory_space<vmem>>, %arg8: memref<16x1xf32, #tpu.memory_space<vmem>>, %arg9: memref<1x1xf32, #tpu.memory_space<vmem>>, %arg10: memref<1x8xf32, #tpu.memory_space<vmem>>) attributes {dimension_semantics = [#tpu.dimension_semantics<parallel>], iteration_bounds = array<i64: 1>, scalar_prefetch = 0 : i64, scratch_operands = 0 : i64, tpu.core_type = #tpu.core_type<tc>, window_params = [{transform_indices = @transform_0, window_bounds = array<i64: 8, 5>}, {pipeline_mode = #tpu.pipeline_mode<synchronous>, transform_indices = @transform_1, window_bounds = array<i64: 64, 5>}, {pipeline_mode = #tpu.pipeline_mode<synchronous>, transform_indices = @transform_2, window_bounds = array<i64: 64, 1>}, {pipeline_mode = #tpu.pipeline_mode<synchronous>, transform_indices = @transform_3, window_bounds = array<i64: 32, 64>}, {pipeline_mode = #tpu.pipeline_mode<synchronous>, transform_indices = @transform_4, window_bounds = array<i64: 32, 1>}, {pipeline_mode = #tpu.pipeline_mode<synchronous>, transform_indices = @transform_5, window_bounds = array<i64: 16, 32>}, {pipeline_mode = #tpu.pipeline_mode<synchronous>, transform_indices = @transform_6, window_bounds = array<i64: 16, 1>}, {pipeline_mode = #tpu.pipeline_mode<synchronous>, transform_indices = @transform_7, window_bounds = array<i64: 16, 1>}, {pipeline_mode = #tpu.pipeline_mode<synchronous>, transform_indices = @transform_8, window_bounds = array<i64: 1, 1>}, {transform_indices = @transform_9, window_bounds = array<i64: 1, 8>}]} {
    %c0 = arith.constant 0 : index
    %c0_0 = arith.constant 0 : index
    %0 = vector.load %arg1[%c0, %c0_0] : memref<8x5xf32, #tpu.memory_space<vmem>>, vector<8x5xf32>
    %c0_1 = arith.constant 0 : index
    %c0_2 = arith.constant 0 : index
    %1 = vector.load %arg2[%c0_1, %c0_2] : memref<64x5xf32, #tpu.memory_space<vmem>>, vector<64x5xf32>
    %cst = arith.constant dense<0.000000e+00> : vector<64x8xf32>
    %2 = tpu.matmul %1, %0, %cst {dimension_numbers = #tpu.dot_dimension_numbers<[1], [1], [0], [0], [0, 0, 1, 0], [], []>} : vector<64x5xf32>, vector<8x5xf32>, vector<64x8xf32> -> vector<64x8xf32>
    %c0_3 = arith.constant 0 : index
    %c0_4 = arith.constant 0 : index
    %3 = vector.load %arg3[%c0_3, %c0_4] : memref<64x1xf32, #tpu.memory_space<vmem>>, vector<64x1xf32>
    %4 = vector.broadcast %3 : vector<64x1xf32> to vector<64x8xf32>
    %5 = arith.addf %2, %4 : vector<64x8xf32>
    %cst_5 = arith.constant 0.000000e+00 : f32
    %6 = vector.broadcast %cst_5 : f32 to vector<64x8xf32>
    %7 = arith.maximumf %5, %6 : vector<64x8xf32>
    %c0_6 = arith.constant 0 : index
    %c0_7 = arith.constant 0 : index
    %8 = vector.load %arg4[%c0_6, %c0_7] : memref<32x64xf32, #tpu.memory_space<vmem>>, vector<32x64xf32>
    %cst_8 = arith.constant dense<0.000000e+00> : vector<32x8xf32>
    %9 = tpu.matmul %8, %7, %cst_8 {dimension_numbers = #tpu.dot_dimension_numbers<[1], [0], [0], [1], [0, 0, 1, 1], [], []>} : vector<32x64xf32>, vector<64x8xf32>, vector<32x8xf32> -> vector<32x8xf32>
    %c0_9 = arith.constant 0 : index
    %c0_10 = arith.constant 0 : index
    %10 = vector.load %arg5[%c0_9, %c0_10] : memref<32x1xf32, #tpu.memory_space<vmem>>, vector<32x1xf32>
    %11 = vector.broadcast %10 : vector<32x1xf32> to vector<32x8xf32>
    %12 = arith.addf %9, %11 : vector<32x8xf32>
    %cst_11 = arith.constant 0.000000e+00 : f32
    %13 = vector.broadcast %cst_11 : f32 to vector<32x8xf32>
    %14 = arith.maximumf %12, %13 : vector<32x8xf32>
    %c0_12 = arith.constant 0 : index
    %c0_13 = arith.constant 0 : index
    %15 = vector.load %arg6[%c0_12, %c0_13] : memref<16x32xf32, #tpu.memory_space<vmem>>, vector<16x32xf32>
    %cst_14 = arith.constant dense<0.000000e+00> : vector<16x8xf32>
    %16 = tpu.matmul %15, %14, %cst_14 {dimension_numbers = #tpu.dot_dimension_numbers<[1], [0], [0], [1], [0, 0, 1, 1], [], []>} : vector<16x32xf32>, vector<32x8xf32>, vector<16x8xf32> -> vector<16x8xf32>
    %c0_15 = arith.constant 0 : index
    %c0_16 = arith.constant 0 : index
    %17 = vector.load %arg7[%c0_15, %c0_16] : memref<16x1xf32, #tpu.memory_space<vmem>>, vector<16x1xf32>
    %18 = vector.broadcast %17 : vector<16x1xf32> to vector<16x8xf32>
    %19 = arith.addf %16, %18 : vector<16x8xf32>
    %cst_17 = arith.constant 0.000000e+00 : f32
    %20 = vector.broadcast %cst_17 : f32 to vector<16x8xf32>
    %21 = arith.maximumf %19, %20 : vector<16x8xf32>
    %c0_18 = arith.constant 0 : index
    %c0_19 = arith.constant 0 : index
    %22 = vector.load %arg8[%c0_18, %c0_19] : memref<16x1xf32, #tpu.memory_space<vmem>>, vector<16x1xf32>
    %23 = vector.broadcast %22 : vector<16x1xf32> to vector<16x8xf32>
    %24 = arith.mulf %23, %21 : vector<16x8xf32>
    %cst_20 = arith.constant dense<0.000000e+00> : vector<8xf32>
    %25 = vector.multi_reduction <add>, %24, %cst_20 [0] : vector<16x8xf32> to vector<8xf32>
    %26 = vector.shape_cast %25 : vector<8xf32> to vector<1x8xf32>
    %c0_21 = arith.constant 0 : index
    %c0_22 = arith.constant 0 : index
    %27 = vector.load %arg9[%c0_21, %c0_22] : memref<1x1xf32, #tpu.memory_space<vmem>>, vector<1x1xf32>
    %28 = vector.broadcast %27 : vector<1x1xf32> to vector<1x8xf32>
    %29 = arith.addf %26, %28 : vector<1x8xf32>
    %c0_23 = arith.constant 0 : index
    %c0_24 = arith.constant 0 : index
    %30 = vector.load %arg10[%c0_23, %c0_24] : memref<1x8xf32, #tpu.memory_space<vmem>>, vector<1x8xf32>
    tpu.vector_store %arg10[%c0_23, %c0_24], %29 {strides = array<i32>} : memref<1x8xf32, #tpu.memory_space<vmem>>, vector<1x8xf32>,
    return
  }
  func.func @transform_0(%arg0: i32) -> (i32, i32) {
    %c0_i32 = arith.constant 0 : i32
    %c0_i32_0 = arith.constant 0 : i32
    return %arg0, %c0_i32 : i32, i32
  }
  func.func @transform_1(%arg0: i32) -> (i32, i32) {
    %c0_i32 = arith.constant 0 : i32
    %c0_i32_0 = arith.constant 0 : i32
    %c0_i32_1 = arith.constant 0 : i32
    return %c0_i32, %c0_i32_0 : i32, i32
  }
  func.func @transform_2(%arg0: i32) -> (i32, i32) {
    %c0_i32 = arith.constant 0 : i32
    %c0_i32_0 = arith.constant 0 : i32
    %c0_i32_1 = arith.constant 0 : i32
    return %c0_i32, %c0_i32_0 : i32, i32
  }
  func.func @transform_3(%arg0: i32) -> (i32, i32) {
    %c0_i32 = arith.constant 0 : i32
    %c0_i32_0 = arith.constant 0 : i32
    %c0_i32_1 = arith.constant 0 : i32
    return %c0_i32, %c0_i32_0 : i32, i32
  }
  func.func @transform_4(%arg0: i32) -> (i32, i32) {
    %c0_i32 = arith.constant 0 : i32
    %c0_i32_0 = arith.constant 0 : i32
    %c0_i32_1 = arith.constant 0 : i32
    return %c0_i32, %c0_i32_0 : i32, i32
  }
  func.func @transform_5(%arg0: i32) -> (i32, i32) {
    %c0_i32 = arith.constant 0 : i32
    %c0_i32_0 = arith.constant 0 : i32
    %c0_i32_1 = arith.constant 0 : i32
    return %c0_i32, %c0_i32_0 : i32, i32
  }
  func.func @transform_6(%arg0: i32) -> (i32, i32) {
    %c0_i32 = arith.constant 0 : i32
    %c0_i32_0 = arith.constant 0 : i32
    %c0_i32_1 = arith.constant 0 : i32
    return %c0_i32, %c0_i32_0 : i32, i32
  }
  func.func @transform_7(%arg0: i32) -> (i32, i32) {
    %c0_i32 = arith.constant 0 : i32
    %c0_i32_0 = arith.constant 0 : i32
    %c0_i32_1 = arith.constant 0 : i32
    return %c0_i32, %c0_i32_0 : i32, i32
  }
  func.func @transform_8(%arg0: i32) -> (i32, i32) {
    %c0_i32 = arith.constant 0 : i32
    %c0_i32_0 = arith.constant 0 : i32
    %c0_i32_1 = arith.constant 0 : i32
    return %c0_i32, %c0_i32_0 : i32, i32
  }
  func.func @transform_9(%arg0: i32) -> (i32, i32) {
    %c0_i32 = arith.constant 0 : i32
    %c0_i32_0 = arith.constant 0 : i32
    return %c0_i32, %arg0 : i32, i32
  }
}

</mosaic_0001>

<llo_original>
// kernel: tpu_custom_call.1
$region0: #{tpu_custom_call.1}
  #allocation0 [shape = 'u32[]', space=smem, size = 0x4, offset = 0x4, fixed_abs, tag = 'smem constant byte address 0x4 - core index']
  #allocation1 [shape = 'u32[144,128]{1,0:T(1,128)}', space=vmem, size = 0x12000, scoped, tag = 'internal scratch']
  #allocation2 [shape = 'f32[1,1]{1,0:T(1,128)S(1)}', space=vmem, size = 0x200, scoped, tag = 'scoped memory for tpu_custom_call.1']
  %s0 = inlined_call_operand.vmem [shape: f32[8,5], index: 0, kind: input, shape index: {}]
  %s1 = inlined_call_operand.vmem [shape: f32[64,5], index: 1, kind: input, shape index: {}]
  %s2 = inlined_call_operand.vmem [shape: f32[64,1], index: 2, kind: input, shape index: {}]
  %s3 = inlined_call_operand.vmem [shape: f32[32,64], index: 3, kind: input, shape index: {}]
  %s4 = inlined_call_operand.vmem [shape: f32[32,1], index: 4, kind: input, shape index: {}]
  %s5 = inlined_call_operand.vmem [shape: f32[16,32], index: 5, kind: input, shape index: {}]
  %s6 = inlined_call_operand.vmem [shape: f32[16,1], index: 6, kind: input, shape index: {}]
  %s7 = inlined_call_operand.vmem [shape: f32[16,1], index: 7, kind: input, shape index: {}]
  %s8 = inlined_call_operand.<no memory space> [shape: f32[1,1], index: 8, kind: input, shape index: {}]
  %s9 = inlined_call_operand.hbm [shape: f32[1,8], index: 9, kind: output, shape index: {}]
  %s10 = sld [smem:[#allocation0]]
  $region46: #{tpu_custom_call.1} parent=0
    _
  %s12 = ssub.s32 1, %s10
  %s13 = scalar_select 0, %s12, %s10
  %v14 = vstv %s8
  %15 = vst [vmem:[#allocation2] sm:$0x1] %v14
  $region1: #{tpu_custom_call.1} parent=0
    #allocation3 [shape = 'u8[512]{0}', space=vmem, size = 0x400, scoped, tag = 'output window, operand 0, single buffered']
    #allocation4 [shape = 's32[1]{0}', space=sflag, size = 0x4, scoped, tag = 'scoped memory for tpu_custom_call.1']
    %16 = vsyncpa [#allocation4], 0
    // Predicated region
    $region2: #{tpu_custom_call.1} parent=1 // pred_check
      _
    $region3: #{tpu_custom_call.1} parent=1 // pred_check_branch
      %18 = sbr.rel (0) target = $region5
    $region4: #{tpu_custom_call.1} parent=1 // pred_region
      _
    $region5: #{tpu_custom_call.1} parent=1 // pred_fallthru
      _
    // Predicated region
    $region6: #{tpu_custom_call.1} parent=1 // pred_check
      _
    $region7: #{tpu_custom_call.1} parent=1 // pred_check_branch
      %20 = sbr.rel (0) target = $region9
    $region8: #{tpu_custom_call.1} parent=1 // pred_region
      _
    $region9: #{tpu_custom_call.1} parent=1 // pred_fallthru
      _
    // Predicated region
    $region10: #{tpu_custom_call.1} parent=1 // pred_check
      _
    $region11: #{tpu_custom_call.1} parent=1 // pred_check_branch
      %22 = sbr.rel (0) target = $region13
    $region12: #{tpu_custom_call.1} parent=1 // pred_region
      _
    $region13: #{tpu_custom_call.1} parent=1 // pred_fallthru
      _
    // Predicated region
    $region14: #{tpu_custom_call.1} parent=1 // pred_check
      _
    $region15: #{tpu_custom_call.1} parent=1 // pred_check_branch
      %24 = sbr.rel (0) target = $region17
    $region16: #{tpu_custom_call.1} parent=1 // pred_region
      _
    $region17: #{tpu_custom_call.1} parent=1 // pred_fallthru
      _
    // Predicated region
    $region18: #{tpu_custom_call.1} parent=1 // pred_check
      _
    $region19: #{tpu_custom_call.1} parent=1 // pred_check_branch
      %26 = sbr.rel (0) target = $region21
    $region20: #{tpu_custom_call.1} parent=1 // pred_region
      _
    $region21: #{tpu_custom_call.1} parent=1 // pred_fallthru
      _
    // Predicated region
    $region22: #{tpu_custom_call.1} parent=1 // pred_check
      _
    $region23: #{tpu_custom_call.1} parent=1 // pred_check_branch
      %28 = sbr.rel (0) target = $region25
    $region24: #{tpu_custom_call.1} parent=1 // pred_region
      _
    $region25: #{tpu_custom_call.1} parent=1 // pred_fallthru
      _
    // Predicated region
    $region26: #{tpu_custom_call.1} parent=1 // pred_check
      _
    $region27: #{tpu_custom_call.1} parent=1 // pred_check_branch
      %30 = sbr.rel (0) target = $region29
    $region28: #{tpu_custom_call.1} parent=1 // pred_region
      _
    $region29: #{tpu_custom_call.1} parent=1 // pred_fallthru
      _
    // Predicated region
    $region30: #{tpu_custom_call.1} parent=1 // pred_check
      _
    $region31: #{tpu_custom_call.1} parent=1 // pred_check_branch
      %32 = sbr.rel (0) target = $region33
    $region32: #{tpu_custom_call.1} parent=1 // pred_region
      _
    $region33: #{tpu_custom_call.1} parent=1 // pred_fallthru
      _
    // Predicated region
    $region34: #{tpu_custom_call.1} parent=1 // pred_check
      _
    $region35: #{tpu_custom_call.1} parent=1 // pred_check_branch
      %34 = sbr.rel (0) target = $region37
    $region36: #{tpu_custom_call.1} parent=1 // pred_region
      _
    $region37: #{tpu_custom_call.1} parent=1 // pred_fallthru
      _
    %v35 = vld [vmem:[%s0] sm:$0xff]
    %v36 = vld [vmem:[%s1] sm:$0xff]
    %v37 = vld [vmem:[%s1 + $0x8] sm:$0xff]
    %v38 = vld [vmem:[%s1 + $0x10] sm:$0xff]
    %v39 = vld [vmem:[%s1 + $0x18] sm:$0xff]
    %v40 = vld [vmem:[%s1 + $0x20] sm:$0xff]
    %v41 = vld [vmem:[%s1 + $0x28] sm:$0xff]
    %v42 = vld [vmem:[%s1 + $0x30] sm:$0xff]
    %v43 = vld [vmem:[%s1 + $0x38] sm:$0xff]
    %v44 = vld [vmem:[%s2] sm:$0xff]
    %v45 = vld [vmem:[%s2 + $0x8] sm:$0xff]
    %v46 = vld [vmem:[%s2 + $0x10] sm:$0xff]
    %v47 = vld [vmem:[%s2 + $0x18] sm:$0xff]
    %v48 = vld [vmem:[%s2 + $0x20] sm:$0xff]
    %v49 = vld [vmem:[%s2 + $0x28] sm:$0xff]
    %v50 = vld [vmem:[%s2 + $0x30] sm:$0xff]
    %v51 = vld [vmem:[%s2 + $0x38] sm:$0xff]
    %53 = vset.pattern.permute.xlu0 0
    %54 = vperm.xlu0 %53, %v44
    %v55 = vpop.permute.xlu0 %54
    %58 = vset.pattern.permute.xlu0 0
    %59 = vperm.xlu0 %58, %v45
    %v60 = vpop.permute.xlu0 %59
    %63 = vset.pattern.permute.xlu0 0
    %64 = vperm.xlu0 %63, %v46
    %v65 = vpop.permute.xlu0 %64
    %68 = vset.pattern.permute.xlu0 0
    %69 = vperm.xlu0 %68, %v47
    %v70 = vpop.permute.xlu0 %69
    %73 = vset.pattern.permute.xlu0 0
    %74 = vperm.xlu0 %73, %v48
    %v75 = vpop.permute.xlu0 %74
    %78 = vset.pattern.permute.xlu0 0
    %79 = vperm.xlu0 %78, %v49
    %v80 = vpop.permute.xlu0 %79
    %83 = vset.pattern.permute.xlu0 0
    %84 = vperm.xlu0 %83, %v50
    %v85 = vpop.permute.xlu0 %84
    %88 = vset.pattern.permute.xlu0 0
    %89 = vperm.xlu0 %88, %v51
    %v90 = vpop.permute.xlu0 %89
    %vm92 = vcmask 39936
    %v94 = vsel %vm92, %v36, 0
    %v97 = vsel %vm92, %v37, 0
    %v100 = vsel %vm92, %v38, 0
    %v103 = vsel %vm92, %v39, 0
    %v106 = vsel %vm92, %v40, 0
    %v109 = vsel %vm92, %v41, 0
    %v112 = vsel %vm92, %v42, 0
    %v115 = vsel %vm92, %v43, 0
    %v118 = vsel %vm92, %v35, 0
    %120 = vmatprep.subr.mxu0 0.0
    %121 = vmatpush1.xpose.msra.mxu0 %v118
    %122 = vmatprep.subr.mxu0 0.0
    %123 = vmatpush1.xpose.msra.mxu0 0.0
    %124 = vmatprep.subr.mxu0 0.0
    %125 = vmatpush1.xpose.msra.mxu0 0.0
    %126 = vmatprep.subr.mxu0 0.0
    %127 = vmatpush1.xpose.msra.mxu0 0.0
    %128 = vmatprep.subr.mxu0 0.0
    %129 = vmatpush1.xpose.msra.mxu0 0.0
    %130 = vmatprep.subr.mxu0 0.0
    %131 = vmatpush1.xpose.msra.mxu0 0.0
    %132 = vmatprep.subr.mxu0 0.0
    %133 = vmatpush1.xpose.msra.mxu0 0.0
    %134 = vmatprep.subr.mxu0 0.0
    %135 = vmatpush1.xpose.msra.mxu0 0.0
    %136 = vmatprep.subr.mxu0 0.0
    %137 = vmatpush1.xpose.msra.mxu0 0.0
    %138 = vmatprep.subr.mxu0 0.0
    %139 = vmatpush1.xpose.msra.mxu0 0.0
    %140 = vmatprep.subr.mxu0 0.0
    %141 = vmatpush1.xpose.msra.mxu0 0.0
    %142 = vmatprep.subr.mxu0 0.0
    %143 = vmatpush1.xpose.msra.mxu0 0.0
    %144 = vmatprep.subr.mxu0 0.0
    %145 = vmatpush1.xpose.msra.mxu0 0.0
    %146 = vmatprep.subr.mxu0 0.0
    %147 = vmatpush1.xpose.msra.mxu0 0.0
    %148 = vmatprep.subr.mxu0 0.0
    %149 = vmatpush1.xpose.msra.mxu0 0.0
    %150 = vmatprep.subr.mxu0 0.0
    %151 = vmatpush1.xpose.msra.mxu0 0.0
    %152 = vmatprep.subr.mxu0 0.0
    %153 = vmatpush1.xpose.msra.mxu0 0.0
    %154 = vmatprep.subr.mxu0 0.0
    %155 = vmatpush1.xpose.msra.mxu0 0.0
    %156 = vmatprep.subr.mxu0 0.0
    %157 = vmatpush1.xpose.msra.mxu0 0.0
    %158 = vmatprep.subr.mxu0 0.0
    %159 = vmatpush1.xpose.msra.mxu0 0.0
    %160 = vmatprep.subr.mxu0 0.0
    %161 = vmatpush1.xpose.msra.mxu0 0.0
    %162 = vmatprep.subr.mxu0 0.0
    %163 = vmatpush1.xpose.msra.mxu0 0.0
    %164 = vmatprep.subr.mxu0 0.0
    %165 = vmatpush1.xpose.msra.mxu0 0.0
    %166 = vmatprep.subr.mxu0 0.0
    %167 = vmatpush1.xpose.msra.mxu0 0.0
    %168 = vmatprep.subr.mxu0 0.0
    %169 = vmatpush1.xpose.msra.mxu0 0.0
    %170 = vmatprep.subr.mxu0 0.0
    %171 = vmatpush1.xpose.msra.mxu0 0.0
    %172 = vmatprep.subr.mxu0 0.0
    %173 = vmatpush1.xpose.msra.mxu0 0.0
    %174 = vmatprep.subr.mxu0 0.0
    %175 = vmatpush1.xpose.msra.mxu0 0.0
    %176 = vmatprep.subr.mxu0 0.0
    %177 = vmatpush1.xpose.msra.mxu0 0.0
    %178 = vmatprep.subr.mxu0 0.0
    %179 = vmatpush1.xpose.msra.mxu0 0.0
    %180 = vmatprep.subr.mxu0 0.0
    %181 = vmatpush1.xpose.msra.mxu0 0.0
    %182 = vmatprep.subr.mxu0 0.0
    %183 = vmatpush1.xpose.msra.mxu0 0.0
    %184 = vmatprep.mubr.f32.mxu0 0.0
    %185 = vmatmul.mubr.f32.gmra.mrb[0].mxu0 %v94
    %v186 = vpop.f32.mrb[0].mxu0
    %v187 = vadd.f32 %v55, %v186
    %v188 = vpop.f32.mrb[0].mxu0
    %189 = vmatprep.mubr.f32.mxu0 0.0
    %190 = vmatmul.mubr.f32.gmra.mrb[0].mxu0 %v97
    %v191 = vpop.f32.mrb[0].mxu0
    %v192 = vadd.f32 %v60, %v191
    %v193 = vpop.f32.mrb[0].mxu0
    %194 = vmatprep.mubr.f32.mxu0 0.0
    %195 = vmatmul.mubr.f32.gmra.mrb[0].mxu0 %v100
    %v196 = vpop.f32.mrb[0].mxu0
    %v197 = vadd.f32 %v65, %v196
    %v198 = vpop.f32.mrb[0].mxu0
    %199 = vmatprep.mubr.f32.mxu0 0.0
    %200 = vmatmul.mubr.f32.gmra.mrb[0].mxu0 %v103
    %v201 = vpop.f32.mrb[0].mxu0
    %v202 = vadd.f32 %v70, %v201
    %v203 = vpop.f32.mrb[0].mxu0
    %204 = vmatprep.mubr.f32.mxu0 0.0
    %205 = vmatmul.mubr.f32.gmra.mrb[0].mxu0 %v106
    %v206 = vpop.f32.mrb[0].mxu0
    %v207 = vadd.f32 %v75, %v206
    %v208 = vpop.f32.mrb[0].mxu0
    %209 = vmatprep.mubr.f32.mxu0 0.0
    %210 = vmatmul.mubr.f32.gmra.mrb[0].mxu0 %v109
    %v211 = vpop.f32.mrb[0].mxu0
    %v212 = vadd.f32 %v80, %v211
    %v213 = vpop.f32.mrb[0].mxu0
    %214 = vmatprep.mubr.f32.mxu0 0.0
    %215 = vmatmul.mubr.f32.gmra.mrb[0].mxu0 %v112
    %v216 = vpop.f32.mrb[0].mxu0
    %v217 = vadd.f32 %v85, %v216
    %v218 = vpop.f32.mrb[0].mxu0
    %219 = vmatprep.mubr.f32.mxu0 0.0
    %220 = vmatmul.mubr.f32.gmra.mrb[0].mxu0 %v115
    %v221 = vpop.f32.mrb[0].mxu0
    %v222 = vadd.f32 %v90, %v221
    %v223 = vpop.f32.mrb[0].mxu0
    %224 = vdwg.mxu0
    %v225 = vmax.f32 %v187, 0.0
    %v226 = vmax.f32 %v192, 0.0
    %v227 = vmax.f32 %v197, 0.0
    %v228 = vmax.f32 %v202, 0.0
    %v229 = vmax.f32 %v207, 0.0
    %v230 = vmax.f32 %v212, 0.0
    %v231 = vmax.f32 %v217, 0.0
    %v232 = vmax.f32 %v222, 0.0
    %v233 = vld [vmem:[%s3] sm:$0xff]
    %v234 = vld [vmem:[%s3 + $0x8] sm:$0xff]
    %v235 = vld [vmem:[%s3 + $0x10] sm:$0xff]
    %v236 = vld [vmem:[%s3 + $0x18] sm:$0xff]
    %v237 = vld [vmem:[%s4] sm:$0xff]
    %v238 = vld [vmem:[%s4 + $0x8] sm:$0xff]
    %v239 = vld [vmem:[%s4 + $0x10] sm:$0xff]
    %v240 = vld [vmem:[%s4 + $0x18] sm:$0xff]
    %242 = vset.pattern.permute.xlu0 0
    %243 = vperm.xlu0 %242, %v237
    %v244 = vpop.permute.xlu0 %243
    %247 = vset.pattern.permute.xlu0 0
    %248 = vperm.xlu0 %247, %v238
    %v249 = vpop.permute.xlu0 %248
    %252 = vset.pattern.permute.xlu0 0
    %253 = vperm.xlu0 %252, %v239
    %v254 = vpop.permute.xlu0 %253
    %257 = vset.pattern.permute.xlu0 0
    %258 = vperm.xlu0 %257, %v240
    %v259 = vpop.permute.xlu0 %258
    %vm261 = vcmask 523264
    %v263 = vsel %vm261, %v233, 0
    %v266 = vsel %vm261, %v234, 0
    %v269 = vsel %vm261, %v235, 0
    %v272 = vsel %vm261, %v236, 0
    %274 = vmatprep.subr.mxu0 0.0
    %275 = vmatpush1.msra.mxu0 %v225
    %276 = vmatprep.subr.mxu0 0.0
    %277 = vmatpush1.msra.mxu0 %v226
    %278 = vmatprep.subr.mxu0 0.0
    %279 = vmatpush1.msra.mxu0 %v227
    %280 = vmatprep.subr.mxu0 0.0
    %281 = vmatpush1.msra.mxu0 %v228
    %282 = vmatprep.subr.mxu0 0.0
    %283 = vmatpush1.msra.mxu0 %v229
    %284 = vmatprep.subr.mxu0 0.0
    %285 = vmatpush1.msra.mxu0 %v230
    %286 = vmatprep.subr.mxu0 0.0
    %287 = vmatpush1.msra.mxu0 %v231
    %288 = vmatprep.subr.mxu0 0.0
    %289 = vmatpush1.msra.mxu0 %v232
    %290 = vmatprep.subr.mxu0 0.0
    %291 = vmatpush1.msra.mxu0 0.0
    %292 = vmatprep.subr.mxu0 0.0
    %293 = vmatpush1.msra.mxu0 0.0
    %294 = vmatprep.subr.mxu0 0.0
    %295 = vmatpush1.msra.mxu0 0.0
    %296 = vmatprep.subr.mxu0 0.0
    %297 = vmatpush1.msra.mxu0 0.0
    %298 = vmatprep.subr.mxu0 0.0
    %299 = vmatpush1.msra.mxu0 0.0
    %300 = vmatprep.subr.mxu0 0.0
    %301 = vmatpush1.msra.mxu0 0.0
    %302 = vmatprep.subr.mxu0 0.0
    %303 = vmatpush1.msra.mxu0 0.0
    %304 = vmatprep.subr.mxu0 0.0
    %305 = vmatpush1.msra.mxu0 0.0
    %306 = vmatprep.subr.mxu0 0.0
    %307 = vmatpush1.msra.mxu0 0.0
    %308 = vmatprep.subr.mxu0 0.0
    %309 = vmatpush1.msra.mxu0 0.0
    %310 = vmatprep.subr.mxu0 0.0
    %311 = vmatpush1.msra.mxu0 0.0
    %312 = vmatprep.subr.mxu0 0.0
    %313 = vmatpush1.msra.mxu0 0.0
    %314 = vmatprep.subr.mxu0 0.0
    %315 = vmatpush1.msra.mxu0 0.0
    %316 = vmatprep.subr.mxu0 0.0
    %317 = vmatpush1.msra.mxu0 0.0
    %318 = vmatprep.subr.mxu0 0.0
    %319 = vmatpush1.msra.mxu0 0.0
    %320 = vmatprep.subr.mxu0 0.0
    %321 = vmatpush1.msra.mxu0 0.0
    %322 = vmatprep.subr.mxu0 0.0
    %323 = vmatpush1.msra.mxu0 0.0
    %324 = vmatprep.subr.mxu0 0.0
    %325 = vmatpush1.msra.mxu0 0.0
    %326 = vmatprep.subr.mxu0 0.0
    %327 = vmatpush1.msra.mxu0 0.0
    %328 = vmatprep.subr.mxu0 0.0
    %329 = vmatpush1.msra.mxu0 0.0
    %330 = vmatprep.subr.mxu0 0.0
    %331 = vmatpush1.msra.mxu0 0.0
    %332 = vmatprep.subr.mxu0 0.0
    %333 = vmatpush1.msra.mxu0 0.0
    %334 = vmatprep.subr.mxu0 0.0
    %335 = vmatpush1.msra.mxu0 0.0
    %336 = vmatprep.subr.mxu0 0.0
    %337 = vmatpush1.msra.mxu0 0.0
    %338 = vmatprep.mubr.f32.mxu0 0.0
    %339 = vmatmul.mubr.f32.gmra.mrb[0].mxu0 %v263
    %v340 = vpop.f32.mrb[0].mxu0
    %v341 = vadd.f32 %v244, %v340
    %v342 = vpop.f32.mrb[0].mxu0
    %343 = vmatprep.mubr.f32.mxu0 0.0
    %344 = vmatmul.mubr.f32.gmra.mrb[0].mxu0 %v266
    %v345 = vpop.f32.mrb[0].mxu0
    %v346 = vadd.f32 %v249, %v345
    %v347 = vpop.f32.mrb[0].mxu0
    %348 = vmatprep.mubr.f32.mxu0 0.0
    %349 = vmatmul.mubr.f32.gmra.mrb[0].mxu0 %v269
    %v350 = vpop.f32.mrb[0].mxu0
    %v351 = vadd.f32 %v254, %v350
    %v352 = vpop.f32.mrb[0].mxu0
    %353 = vmatprep.mubr.f32.mxu0 0.0
    %354 = vmatmul.mubr.f32.gmra.mrb[0].mxu0 %v272
    %v355 = vpop.f32.mrb[0].mxu0
    %v356 = vadd.f32 %v259, %v355
    %v357 = vpop.f32.mrb[0].mxu0
    %358 = vdwg.mxu0
    %v359 = vmax.f32 %v341, 0.0
    %v360 = vmax.f32 %v346, 0.0
    %v361 = vmax.f32 %v351, 0.0
    %v362 = vmax.f32 %v356, 0.0
    %v363 = vld [vmem:[%s5] sm:$0xff]
    %v364 = vld [vmem:[%s5 + $0x8] sm:$0xff]
    %v365 = vld [vmem:[%s6] sm:$0xff]
    %v366 = vld [vmem:[%s6 + $0x8] sm:$0xff]
    %368 = vset.pattern.permute.xlu0 0
    %369 = vperm.xlu0 %368, %v365
    %v370 = vpop.permute.xlu0 %369
    %373 = vset.pattern.permute.xlu0 0
    %374 = vperm.xlu0 %373, %v366
    %v375 = vpop.permute.xlu0 %374
    %vm377 = vcmask 261120
    %v379 = vsel %vm377, %v363, 0
    %v382 = vsel %vm377, %v364, 0
    %384 = vmatprep.subr.mxu0 0.0
    %385 = vmatpush1.msra.mxu0 %v359
    %386 = vmatprep.subr.mxu0 0.0
    %387 = vmatpush1.msra.mxu0 %v360
    %388 = vmatprep.subr.mxu0 0.0
    %389 = vmatpush1.msra.mxu0 %v361
    %390 = vmatprep.subr.mxu0 0.0
    %391 = vmatpush1.msra.mxu0 %v362
    %392 = vmatprep.subr.mxu0 0.0
    %393 = vmatpush1.msra.mxu0 0.0
    %394 = vmatprep.subr.mxu0 0.0
    %395 = vmatpush1.msra.mxu0 0.0
    %396 = vmatprep.subr.mxu0 0.0
    %397 = vmatpush1.msra.mxu0 0.0
    %398 = vmatprep.subr.mxu0 0.0
    %399 = vmatpush1.msra.mxu0 0.0
    %400 = vmatprep.subr.mxu0 0.0
    %401 = vmatpush1.msra.mxu0 0.0
    %402 = vmatprep.subr.mxu0 0.0
    %403 = vmatpush1.msra.mxu0 0.0
    %404 = vmatprep.subr.mxu0 0.0
    %405 = vmatpush1.msra.mxu0 0.0
    %406 = vmatprep.subr.mxu0 0.0
    %407 = vmatpush1.msra.mxu0 0.0
    %408 = vmatprep.subr.mxu0 0.0
    %409 = vmatpush1.msra.mxu0 0.0
    %410 = vmatprep.subr.mxu0 0.0
    %411 = vmatpush1.msra.mxu0 0.0
    %412 = vmatprep.subr.mxu0 0.0
    %413 = vmatpush1.msra.mxu0 0.0
    %414 = vmatprep.subr.mxu0 0.0
    %415 = vmatpush1.msra.mxu0 0.0
    %416 = vmatprep.subr.mxu0 0.0
    %417 = vmatpush1.msra.mxu0 0.0
    %418 = vmatprep.subr.mxu0 0.0
    %419 = vmatpush1.msra.mxu0 0.0
    %420 = vmatprep.subr.mxu0 0.0
    %421 = vmatpush1.msra.mxu0 0.0
    %422 = vmatprep.subr.mxu0 0.0
    %423 = vmatpush1.msra.mxu0 0.0
    %424 = vmatprep.subr.mxu0 0.0
    %425 = vmatpush1.msra.mxu0 0.0
    %426 = vmatprep.subr.mxu0 0.0
    %427 = vmatpush1.msra.mxu0 0.0
    %428 = vmatprep.subr.mxu0 0.0
    %429 = vmatpush1.msra.mxu0 0.0
    %430 = vmatprep.subr.mxu0 0.0
    %431 = vmatpush1.msra.mxu0 0.0
    %432 = vmatprep.subr.mxu0 0.0
    %433 = vmatpush1.msra.mxu0 0.0
    %434 = vmatprep.subr.mxu0 0.0
    %435 = vmatpush1.msra.mxu0 0.0
    %436 = vmatprep.subr.mxu0 0.0
    %437 = vmatpush1.msra.mxu0 0.0
    %438 = vmatprep.subr.mxu0 0.0
    %439 = vmatpush1.msra.mxu0 0.0
    %440 = vmatprep.subr.mxu0 0.0
    %441 = vmatpush1.msra.mxu0 0.0
    %442 = vmatprep.subr.mxu0 0.0
    %443 = vmatpush1.msra.mxu0 0.0
    %444 = vmatprep.subr.mxu0 0.0
    %445 = vmatpush1.msra.mxu0 0.0
    %446 = vmatprep.subr.mxu0 0.0
    %447 = vmatpush1.msra.mxu0 0.0
    %448 = vmatprep.mubr.f32.mxu0 0.0
    %449 = vmatmul.mubr.f32.gmra.mrb[0].mxu0 %v379
    %v450 = vpop.f32.mrb[0].mxu0
    %v451 = vadd.f32 %v370, %v450
    %v452 = vpop.f32.mrb[0].mxu0
    %453 = vmatprep.mubr.f32.mxu0 0.0
    %454 = vmatmul.mubr.f32.gmra.mrb[0].mxu0 %v382
    %v455 = vpop.f32.mrb[0].mxu0
    %v456 = vadd.f32 %v375, %v455
    %v457 = vpop.f32.mrb[0].mxu0
    %458 = vdwg.mxu0
    %v459 = vmax.f32 %v451, 0.0
    %v460 = vmax.f32 %v456, 0.0
    %v461 = vld [vmem:[%s7] sm:$0xff]
    %v462 = vld [vmem:[%s7 + $0x8] sm:$0xff]
    %464 = vset.pattern.permute.xlu0 0
    %465 = vperm.xlu0 %464, %v461
    %v466 = vpop.permute.xlu0 %465
    %469 = vset.pattern.permute.xlu0 0
    %470 = vperm.xlu0 %469, %v462
    %v471 = vpop.permute.xlu0 %470
    %v473 = vmul.f32 %v466, %v459
    %v474 = vmul.f32 %v471, %v460
    %vm475 = vcmask 64512
    %v476 = vsel %vm475, %v473, 0.0
    %v477 = vsel %vm475, %v474, 0.0
    %v478 = vadd.f32 %v476, %v477
    %v479 = vrot.slane %v478, 4
    %v480 = vadd.f32 %v478, %v479
    %v481 = vrot.slane %v480, 2
    %v482 = vadd.f32 %v480, %v481
    %v483 = vrot.slane %v482, 1
    %v484 = vadd.f32 %v482, %v483
    %v485 = vld [vmem:[#allocation2] sm:$0x1]
    %487 = vset.pattern.permute.xlu0 0
    %488 = vperm.xlu0 %487, %v485
    %v489 = vpop.permute.xlu0 %488
    %v491 = vlaneseq
    %v492 = vshrl.u32 %v491, 7
    %v493 = vsub.s32 0, %v492
    %v494 = vrot.slane %v489, %v493
    %v495 = vadd.f32 %v484, %v494
    %vm496 = vcmask 57344
    %497 = vst.msk [vmem:[#allocation3] sm:$0x1] %vm496, %v495
    // Predicated region
    $region38: #{tpu_custom_call.1} parent=1 // pred_check
      _
    $region39: #{tpu_custom_call.1} parent=1 // pred_check_branch
      %499 = sbr.rel (0) target = $region41
    $region40: #{tpu_custom_call.1} parent=1 // pred_region
      %s501 = ssub.s32 16, 16
      %502 = vsyncadd [#allocation4], %s501
      %s504 = sshll.u32 [#allocation3], 4
      %s505 = int_to_ptr.vmem [resolvable:$true] %s504
      %507 = dma.vmem_to_hbm [thread:$0]  %s505, 16, %s9, [#allocation4]
    $region41: #{tpu_custom_call.1} parent=1 // pred_fallthru
      _
    // Predicated region
    $region42: #{tpu_custom_call.1} parent=1 // pred_check
      _
    $region43: #{tpu_custom_call.1} parent=1 // pred_check_branch
      %509 = sbr.rel (0) target = $region45
    $region44: #{tpu_custom_call.1} parent=1 // pred_region
      %510 = dma.done [#allocation4], 16
    $region45: #{tpu_custom_call.1} parent=1 // pred_fallthru
      _
    %511 = vsyncpa [#allocation4], 1

</llo_original>
